<compile_context>
chip_gen: v7x
topology: tpu7x:2x2x1
jax: 0.10.0
libtpu: 0.0.40
codegen_flags: <defaults>
</compile_context>

<pallas_src>
import jax
import jax.numpy as jnp
from jax.experimental import pallas as pl
from jax.experimental.pallas import tpu as pltpu


def _round_up(n, m):
    return ((n + m - 1) // m) * m


def _cdiv(a, b):
    return (a + b - 1) // b


def _gelu_tanh(x):
    # tanh-approx GELU (== nn.GELU(approximate='tanh')); tanh goes to the EUP.
    # TODO(synk): PyTorch nn.GELU() default is the exact erf form; erf has no
    # guaranteed Mosaic lowering, the tanh approximation differs by < ~1e-3.
    c = 0.7978845608028654  # sqrt(2/pi)
    return 0.5 * x * (1.0 + jnp.tanh(c * (x + 0.044715 * x * x * x)))


def _mlp_kernel(x_ref, w1_ref, b1_ref, w2_ref, b2_ref, o_ref, acc_ref):
    # x_ref:(bm,D) bf16  w1_ref:(D,th) bf16  b1_ref:(1,th) f32
    # w2_ref:(th,D) bf16 b2_ref:(1,D) f32    o_ref:(bm,D)  acc_ref:(bm,D) f32
    hk = pl.program_id(1)

    @pl.when(hk == 0)
    def _init():
        acc_ref[...] = jnp.zeros_like(acc_ref)

    # First GEMM on the MXU with f32 accumulation; bias + GELU in f32.
    h = jnp.dot(x_ref[...], w1_ref[...], preferred_element_type=jnp.float32)
    h = _gelu_tanh(h + b1_ref[...])

    # Second GEMM for this hidden chunk, accumulated into the f32 scratch.
    acc_ref[...] += jnp.dot(h.astype(w2_ref.dtype), w2_ref[...],
                            preferred_element_type=jnp.float32)

    @pl.when(hk == pl.num_programs(1) - 1)
    def _finalize():
        o_ref[...] = (acc_ref[...] + b2_ref[...]).astype(o_ref.dtype)


def mlp_forward(x, w1, b1, w2, b2, *, block_rows=256, block_hidden=512,
                matmul_dtype=jnp.bfloat16):
    """y = GELU(x @ w1 + b1) @ w2 + b2, for x of shape (..., D)."""
    orig_shape = x.shape
    D = orig_shape[-1]
    H = w1.shape[1]
    assert w1.shape == (D, H) and w2.shape == (H, D)
    assert b1.shape == (H,) and b2.shape == (D,)
    out_dtype = x.dtype

    # ---- flatten leading dims: one big (N, D) problem ----------------------
    x2 = x.reshape(-1, D)
    n = x2.shape[0]

    # ---- row tiling ---------------------------------------------------------
    # >= 2 row tiles whenever there is enough work so the "parallel" axis can
    # shard across v7x's two TensorCores; tile size derived from the tile count
    # so awkward n doesn't pad an entire extra tile.
    n_row_tiles = _cdiv(n, block_rows)
    if n > 8:
        n_row_tiles = max(n_row_tiles, 2)
    bm = _round_up(_cdiv(n, n_row_tiles), 8)
    n_pad = _round_up(n, bm)
    n_row_tiles = n_pad // bm
    if n_pad != n:
        x2 = jnp.pad(x2, ((0, n_pad - n), (0, 0)))

    # ---- hidden tiling ------------------------------------------------------
    if H <= block_hidden:
        th, h_pad = H, H
    else:
        th = block_hidden                      # multiple of 128
        h_pad = _round_up(H, th)
    n_h_tiles = h_pad // th
    if h_pad != H:
        # Zero-padded hidden units contribute GELU(0) @ 0 == 0.
        w1 = jnp.pad(w1, ((0, 0), (0, h_pad - H)))
        b1 = jnp.pad(b1, ((0, h_pad - H),))
        w2 = jnp.pad(w2, ((0, h_pad - H), (0, 0)))

    # ---- dtypes: bf16 operands for the MXU, f32 biases / accumulation -------
    x2 = x2.astype(matmul_dtype)
    w1 = w1.astype(matmul_dtype)
    w2 = w2.astype(matmul_dtype)
    b1_2 = b1.astype(jnp.float32).reshape(1, h_pad)
    b2_2 = b2.astype(jnp.float32).reshape(1, D)

    # ---- VMEM budget (double-buffered tiles, padded to (8,128) vregs) -------
    def tile_bytes(r, c, itemsize):
        return _round_up(r, 8) * _round_up(c, 128) * itemsize

    mm_sz = jnp.dtype(matmul_dtype).itemsize
    out_sz = jnp.dtype(out_dtype).itemsize
    est = (2 * tile_bytes(bm, D, mm_sz)        # x double buffer
           + 2 * tile_bytes(bm, D, out_sz)     # out double buffer
           + 2 * tile_bytes(D, th, mm_sz)      # w1 (streams over hk)
           + 2 * tile_bytes(th, D, mm_sz)      # w2 (streams over hk)
           + 2 * tile_bytes(1, th, 4)          # b1
           + 2 * tile_bytes(1, D, 4)           # b2
           + tile_bytes(bm, D, 4)              # f32 accumulator scratch
           + 2 * tile_bytes(bm, th, 4))        # f32 intermediate headroom
    vmem_limit = int(min(64 << 20, max(32 << 20, 2 * est)))

    flops = 4 * n_pad * D * h_pad              # two GEMMs
    weight_bytes = 2 * D * h_pad * mm_sz
    bytes_accessed = (n_pad * D * (mm_sz + out_sz)
                      + weight_bytes * (n_row_tiles if n_h_tiles > 1 else 1)
                      + (h_pad + D) * 4)

    out = pl.pallas_call(
        _mlp_kernel,
        out_shape=jax.ShapeDtypeStruct((n_pad, D), out_dtype),
        grid_spec=pltpu.PrefetchScalarGridSpec(
            num_scalar_prefetch=0,
            # Rows parallel, hidden chunks = reduction axis (last, "arbitrary").
            grid=(n_row_tiles, n_h_tiles),
            in_specs=[
                pl.BlockSpec((bm, D), lambda i, hk: (i, 0)),
                pl.BlockSpec((D, th), lambda i, hk: (0, hk)),
                pl.BlockSpec((1, th), lambda i, hk: (0, hk)),
                pl.BlockSpec((th, D), lambda i, hk: (hk, 0)),
                pl.BlockSpec((1, D), lambda i, hk: (0, 0)),
            ],
            out_specs=pl.BlockSpec((bm, D), lambda i, hk: (i, 0)),
            scratch_shapes=[pltpu.VMEM((bm, D), jnp.float32)],
        ),
        compiler_params=pltpu.CompilerParams(
            dimension_semantics=("parallel", "arbitrary"),
            vmem_limit_bytes=vmem_limit,
        ),
        cost_estimate=pl.CostEstimate(
            flops=int(flops),
            transcendentals=int(n_pad * h_pad),
            bytes_accessed=int(bytes_accessed),
        ),
    )(x2, w1, b1_2, w2, b2_2)

    if n_pad != n:
        out = out[:n]
    return out.reshape(orig_shape)


if __name__ == "__main__":
    # MLP(out_dim=32, hidden_dim=64) applied to x of shape (batch=2, seq=8, 32).
    B, S, D, H = 2, 8, 32, 64
    key = jax.random.PRNGKey(0)
    kx, kw1, kb1, kw2, kb2 = jax.random.split(key, 5)

    x = jax.random.normal(kx, (B, S, D), dtype=jnp.float32)
    w1 = jax.random.normal(kw1, (D, H), dtype=jnp.float32) * 0.1
    b1 = jax.random.normal(kb1, (H,), dtype=jnp.float32) * 0.1
    w2 = jax.random.normal(kw2, (H, D), dtype=jnp.float32) * 0.1
    b2 = jax.random.normal(kb2, (D,), dtype=jnp.float32) * 0.1

    out = jax.block_until_ready(mlp_forward(x, w1, b1, w2, b2))
    assert out.shape == (B, S, D)
    assert out.dtype == x.dtype

    # Reference with matching matmul numerics (bf16 operands, f32 accumulate).
    xb, w1b, w2b = (a.astype(jnp.bfloat16) for a in (x, w1, w2))
    h_ref = jnp.dot(xb, w1b, preferred_element_type=jnp.float32) + b1
    h_ref = _gelu_tanh(h_ref)
    ref = jnp.dot(h_ref.astype(jnp.bfloat16), w2b,
                  preferred_element_type=jnp.float32) + b2
    assert jnp.allclose(out, ref, atol=2e-2, rtol=2e-2), "mismatch vs bf16 reference"

    # Loose sanity check against the full-f32 reference.
    ref32 = jnp.dot(_gelu_tanh(jnp.dot(x, w1) + b1), w2) + b2
    assert jnp.allclose(out, ref32, atol=1e-1, rtol=1e-1), "mismatch vs f32 reference"

    print("KERNEL_OK")
</pallas_src>

<mosaic_0001>
module attributes {stable_mosaic.version = 11 : i64} {
  func.func @_mlp_kernel(%arg0: i32, %arg1: i32, %arg2: memref<8x32xbf16, #tpu.memory_space<vmem>>, %arg3: memref<32x64xbf16, #tpu.memory_space<vmem>>, %arg4: memref<1x64xf32, #tpu.memory_space<vmem>>, %arg5: memref<64x32xbf16, #tpu.memory_space<vmem>>, %arg6: memref<1x32xf32, #tpu.memory_space<vmem>>, %arg7: memref<8x32xf32, #tpu.memory_space<vmem>>, %arg8: memref<8x32xf32, #tpu.memory_space<vmem>>) attributes {dimension_semantics = [#tpu.dimension_semantics<parallel>, #tpu.dimension_semantics<arbitrary>], iteration_bounds = array<i64: 2, 1>, scalar_prefetch = 0 : i64, scratch_operands = 1 : i64, tpu.core_type = #tpu.core_type<tc>, window_params = [{transform_indices = @transform_0, window_bounds = array<i64: 8, 32>}, {transform_indices = @transform_1, window_bounds = array<i64: 32, 64>}, {transform_indices = @transform_2, window_bounds = array<i64: 1, 64>}, {transform_indices = @transform_3, window_bounds = array<i64: 64, 32>}, {pipeline_mode = #tpu.pipeline_mode<synchronous>, transform_indices = @transform_4, window_bounds = array<i64: 1, 32>}, {transform_indices = @transform_5, window_bounds = array<i64: 8, 32>}]} {
    %c0_i32 = arith.constant 0 : i32
    %0 = arith.cmpi eq, %arg1, %c0_i32 : i32
    %1 = arith.extui %0 : i1 to i32
    %c0_i32_0 = arith.constant 0 : i32
    %2 = arith.cmpi ne, %1, %c0_i32_0 : i32
    scf.if %2 {
      %cst_19 = arith.constant 0.000000e+00 : f32
      %31 = vector.broadcast %cst_19 : f32 to vector<8x32xf32>
      %c0_20 = arith.constant 0 : index
      %c0_21 = arith.constant 0 : index
      %32 = vector.load %arg8[%c0_20, %c0_21] : memref<8x32xf32, #tpu.memory_space<vmem>>, vector<8x32xf32>
      tpu.vector_store %arg8[%c0_20, %c0_21], %31 {strides = array<i32>} : memref<8x32xf32, #tpu.memory_space<vmem>>, vector<8x32xf32>,
    } else {
    }
    %c0 = arith.constant 0 : index
    %c0_1 = arith.constant 0 : index
    %3 = vector.load %arg2[%c0, %c0_1] : memref<8x32xbf16, #tpu.memory_space<vmem>>, vector<8x32xbf16>
    %c0_2 = arith.constant 0 : index
    %c0_3 = arith.constant 0 : index
    %4 = vector.load %arg3[%c0_2, %c0_3] : memref<32x64xbf16, #tpu.memory_space<vmem>>, vector<32x64xbf16>
    %cst = arith.constant dense<0.000000e+00> : vector<8x64xf32>
    %5 = tpu.matmul %3, %4, %cst {dimension_numbers = #tpu.dot_dimension_numbers<[1], [0], [0], [1], [0, 0, 1, 1], [], []>} : vector<8x32xbf16>, vector<32x64xbf16>, vector<8x64xf32> -> vector<8x64xf32>
    %c0_4 = arith.constant 0 : index
    %c0_5 = arith.constant 0 : index
    %6 = vector.load %arg4[%c0_4, %c0_5] : memref<1x64xf32, #tpu.memory_space<vmem>>, vector<1x64xf32>
    %7 = vector.broadcast %6 : vector<1x64xf32> to vector<8x64xf32>
    %8 = arith.addf %5, %7 : vector<8x64xf32>
    %cst_6 = arith.constant 5.000000e-01 : f32
    %9 = vector.broadcast %cst_6 : f32 to vector<8x64xf32>
    %10 = arith.mulf %9, %8 : vector<8x64xf32>
    %cst_7 = arith.constant 4.471500e-02 : f32
    %11 = vector.broadcast %cst_7 : f32 to vector<8x64xf32>
    %12 = arith.mulf %11, %8 : vector<8x64xf32>
    %13 = arith.mulf %12, %8 : vector<8x64xf32>
    %14 = arith.mulf %13, %8 : vector<8x64xf32>
    %15 = arith.addf %8, %14 : vector<8x64xf32>
    %cst_8 = arith.constant 0.797884583 : f32
    %16 = vector.broadcast %cst_8 : f32 to vector<8x64xf32>
    %17 = arith.mulf %16, %15 : vector<8x64xf32>
    %18 = math.tanh %17 : vector<8x64xf32>
    %cst_9 = arith.constant 1.000000e+00 : f32
    %19 = vector.broadcast %cst_9 : f32 to vector<8x64xf32>
    %20 = arith.addf %19, %18 : vector<8x64xf32>
    %21 = arith.mulf %10, %20 : vector<8x64xf32>
    %c0_10 = arith.constant 0 : index
    %c0_11 = arith.constant 0 : index
    %22 = vector.load %arg8[%c0_10, %c0_11] : memref<8x32xf32, #tpu.memory_space<vmem>>, vector<8x32xf32>
    %23 = arith.truncf %21 : vector<8x64xf32> to vector<8x64xbf16>
    %c0_12 = arith.constant 0 : index
    %c0_13 = arith.constant 0 : index
    %24 = vector.load %arg5[%c0_12, %c0_13] : memref<64x32xbf16, #tpu.memory_space<vmem>>, vector<64x32xbf16>
    %cst_14 = arith.constant dense<0.000000e+00> : vector<8x32xf32>
    %25 = tpu.matmul %23, %24, %cst_14 {dimension_numbers = #tpu.dot_dimension_numbers<[1], [0], [0], [1], [0, 0, 1, 1], [], []>} : vector<8x64xbf16>, vector<64x32xbf16>, vector<8x32xf32> -> vector<8x32xf32>
    %26 = arith.addf %22, %25 : vector<8x32xf32>
    %c0_15 = arith.constant 0 : index
    %c0_16 = arith.constant 0 : index
    %27 = vector.load %arg8[%c0_15, %c0_16] : memref<8x32xf32, #tpu.memory_space<vmem>>, vector<8x32xf32>
    tpu.vector_store %arg8[%c0_15, %c0_16], %26 {strides = array<i32>} : memref<8x32xf32, #tpu.memory_space<vmem>>, vector<8x32xf32>,
    %c0_i32_17 = arith.constant 0 : i32
    %28 = arith.cmpi eq, %arg1, %c0_i32_17 : i32
    %29 = arith.extui %28 : i1 to i32
    %c0_i32_18 = arith.constant 0 : i32
    %30 = arith.cmpi ne, %29, %c0_i32_18 : i32
    scf.if %30 {
      %c0_19 = arith.constant 0 : index
      %c0_20 = arith.constant 0 : index
      %31 = vector.load %arg8[%c0_19, %c0_20] : memref<8x32xf32, #tpu.memory_space<vmem>>, vector<8x32xf32>
      %c0_21 = arith.constant 0 : index
      %c0_22 = arith.constant 0 : index
      %32 = vector.load %arg6[%c0_21, %c0_22] : memref<1x32xf32, #tpu.memory_space<vmem>>, vector<1x32xf32>
      %33 = vector.broadcast %32 : vector<1x32xf32> to vector<8x32xf32>
      %34 = arith.addf %31, %33 : vector<8x32xf32>
      %c0_23 = arith.constant 0 : index
      %c0_24 = arith.constant 0 : index
      %35 = vector.load %arg7[%c0_23, %c0_24] : memref<8x32xf32, #tpu.memory_space<vmem>>, vector<8x32xf32>
      tpu.vector_store %arg7[%c0_23, %c0_24], %34 {strides = array<i32>} : memref<8x32xf32, #tpu.memory_space<vmem>>, vector<8x32xf32>,
    } else {
    }
    return
  }
  func.func @transform_0(%arg0: i32, %arg1: i32) -> (i32, i32) {
    %c0_i32 = arith.constant 0 : i32
    %c0_i32_0 = arith.constant 0 : i32
    return %arg0, %c0_i32 : i32, i32
  }
  func.func @transform_1(%arg0: i32, %arg1: i32) -> (i32, i32) {
    %c0_i32 = arith.constant 0 : i32
    %c0_i32_0 = arith.constant 0 : i32
    return %c0_i32, %arg1 : i32, i32
  }
  func.func @transform_2(%arg0: i32, %arg1: i32) -> (i32, i32) {
    %c0_i32 = arith.constant 0 : i32
    %c0_i32_0 = arith.constant 0 : i32
    return %c0_i32, %arg1 : i32, i32
  }
  func.func @transform_3(%arg0: i32, %arg1: i32) -> (i32, i32) {
    %c0_i32 = arith.constant 0 : i32
    %c0_i32_0 = arith.constant 0 : i32
    return %arg1, %c0_i32 : i32, i32
  }
  func.func @transform_4(%arg0: i32, %arg1: i32) -> (i32, i32) {
    %c0_i32 = arith.constant 0 : i32
    %c0_i32_0 = arith.constant 0 : i32
    %c0_i32_1 = arith.constant 0 : i32
    return %c0_i32, %c0_i32_0 : i32, i32
  }
  func.func @transform_5(%arg0: i32, %arg1: i32) -> (i32, i32) {
    %c0_i32 = arith.constant 0 : i32
    %c0_i32_0 = arith.constant 0 : i32
    return %arg0, %c0_i32 : i32, i32
  }
}

</mosaic_0001>

<llo_original>
// kernel: tpu_custom_call.1
$region0: #{tpu_custom_call.1}
  #allocation0 [shape = 'u32[]', space=smem, size = 0x4, offset = 0x4, fixed_abs, tag = 'smem constant byte address 0x4 - core index']
  #allocation1 [shape = 'u32[144,128]{1,0:T(1,128)}', space=vmem, size = 0x12000, scoped, tag = 'internal scratch']
  #allocation2 [shape = 'f32[8,32]{1,0:T(8,128)}', space=vmem, size = 0x1000, scoped, tag = 'scratch operand']
  %s0 = inlined_call_operand.vmem [shape: bf16[16,32], index: 0, kind: input, shape index: {}]
  %s1 = inlined_call_operand.vmem [shape: bf16[32,64], index: 1, kind: input, shape index: {}]
  %s2 = inlined_call_operand.vmem [shape: f32[1,64], index: 2, kind: input, shape index: {}]
  %s3 = inlined_call_operand.vmem [shape: bf16[64,32], index: 3, kind: input, shape index: {}]
  %s4 = inlined_call_operand.vmem [shape: f32[1,32], index: 4, kind: input, shape index: {}]
  %s5 = inlined_call_operand.hbm [shape: f32[16,32], index: 5, kind: output, shape index: {}]
  %s6 = sld [smem:[#allocation0]]
  $region61: #{tpu_custom_call.1} parent=0
    _
  %s8 = ssub.s32 1, %s6
  %s9 = scalar_select 0, %s8, %s6
  $region1: #{tpu_custom_call.1} parent=0
    #allocation3 [shape = 'u8[8192]{0}', space=vmem, size = 0x2000, scoped, tag = 'output window, operand 0']
    #allocation4 [shape = 's32[2]{0}', space=sflag, size = 0x8, scoped, tag = 'scoped memory for tpu_custom_call.1']
    %10 = vsyncpa [#allocation4], 0
    %s11 = scalar_lea.sflag [#allocation4], 1
    %12 = vsyncpa %s11, 0
    loop: start=0, step=1, limit=4
    $region2: #{tpu_custom_call.1} parent=1 // loop_pre_header
      _
    $region3: #{tpu_custom_call.1} parent=1 // loop_header
      %s14 = sphi 0, %s18
      %p15 = scmp.ge.s32.totalorder %s14, 4
      %s21 = sphi 0, %s33
      %s22 = sphi 0, %s29
      %s23 = sphi 0, %s21
      %s24 = sphi 0, %s22
      %s25 = sphi 0, %s23
      %s26 = sphi 0, %s24
      %s36 = sphi 0, %s38
      %s39 = sphi 0, %s36
      %s40 = sphi 0, %s39
      %s56 = sphi 0, %s40
      %s62 = sphi 0, %s64
      %s65 = sphi 0, %s62
      %s66 = sphi 0, %s65
      %s82 = sphi 0, %s66
      %s88 = sphi 0, %s90
      %s91 = sphi 0, %s88
      %s92 = sphi 0, %s91
      %s108 = sphi 0, %s92
      %s114 = sphi 0, %s116
      %s117 = sphi 0, %s114
      %s118 = sphi 0, %s117
      %s134 = sphi 0, %s118
      %s138 = sphi 0, %s138
      %s140 = sphi 0, %s138
      %s141 = sphi 0, %s140
      %s155 = sphi 0, %s141
      %s161 = sphi 0, %s163
      %s164 = sphi 0, %s161
      %s165 = sphi 0, %s164
      %s181 = sphi 0, %s165
    $region4: #{tpu_custom_call.1} parent=1 // loop_header_branch
      %17 = sbr.rel (%p15) target = $region8
    $region5: #{tpu_custom_call.1} parent=1 // loop_body
      %s19 = ssub.s32 %s14, 1
      %s20 = ssub.s32 %s14, 2
      %s27 = sadd.s32 1, %s22
      %p28 = scmp.ge.s32.totalorder %s27, 1
      %s29 = scalar_select %p28, 0, %s27
      %s30 = sadd.s32 1, %s21
      %s31 = scalar_select %p28, %s30, %s21
      %p32 = scmp.ge.s32.totalorder %s31, 2
      %s33 = scalar_select %p32, 0, %s31
      %s34 = ssub.s32 %s21, %s33
      %p35 = scmp.eq.s32.totalorder %s34, 0
      %s37 = sadd.s32 %s36, 1
      %s38 = scalar_select %p35, %s36, %s37
      %p41 = pneg %p35
      %p42 = scmp.eq.s32.totalorder %s14, 1
      %p43 = por %p41, %p42
      %p44 = scmp.ne.s32.totalorder %s36, %s39
      %p45 = scmp.eq.s32.totalorder %s14, 0
      %p46 = por %p44, %p45
      %p47 = scmp.ne.s32.totalorder %s36, %s39
      %p48 = scmp.eq.s32.totalorder %s19, 1
      %p49 = por %p47, %p48
      %p50 = scmp.ne.s32.totalorder %s39, %s40
      %p51 = scmp.eq.s32.totalorder %s19, 0
      %p52 = por %p50, %p51
      %p53 = scmp.ne.s32.totalorder %s39, %s40
      %p54 = scmp.eq.s32.totalorder %s20, 1
      %p55 = por %p53, %p54
      %p57 = scmp.ne.s32.totalorder %s40, %s56
      %p58 = scmp.eq.s32.totalorder %s20, 0
      %p59 = por %p57, %p58
      %s60 = ssub.s32 %s22, %s29
      %p61 = scmp.eq.s32.totalorder %s60, 0
      %s63 = sadd.s32 %s62, 1
      %s64 = scalar_select %p61, %s62, %s63
      %p67 = pneg %p61
      %p68 = scmp.eq.s32.totalorder %s14, 1
      %p69 = por %p67, %p68
      %p70 = scmp.ne.s32.totalorder %s62, %s65
      %p71 = scmp.eq.s32.totalorder %s14, 0
      %p72 = por %p70, %p71
      %p73 = scmp.ne.s32.totalorder %s62, %s65
      %p74 = scmp.eq.s32.totalorder %s19, 1
      %p75 = por %p73, %p74
      %p76 = scmp.ne.s32.totalorder %s65, %s66
      %p77 = scmp.eq.s32.totalorder %s19, 0
      %p78 = por %p76, %p77
      %p79 = scmp.ne.s32.totalorder %s65, %s66
      %p80 = scmp.eq.s32.totalorder %s20, 1
      %p81 = por %p79, %p80
      %p83 = scmp.ne.s32.totalorder %s66, %s82
      %p84 = scmp.eq.s32.totalorder %s20, 0
      %p85 = por %p83, %p84
      %s86 = ssub.s32 %s22, %s29
      %p87 = scmp.eq.s32.totalorder %s86, 0
      %s89 = sadd.s32 %s88, 1
      %s90 = scalar_select %p87, %s88, %s89
      %p93 = pneg %p87
      %p94 = scmp.eq.s32.totalorder %s14, 1
      %p95 = por %p93, %p94
      %p96 = scmp.ne.s32.totalorder %s88, %s91
      %p97 = scmp.eq.s32.totalorder %s14, 0
      %p98 = por %p96, %p97
      %p99 = scmp.ne.s32.totalorder %s88, %s91
      %p100 = scmp.eq.s32.totalorder %s19, 1
      %p101 = por %p99, %p100
      %p102 = scmp.ne.s32.totalorder %s91, %s92
      %p103 = scmp.eq.s32.totalorder %s19, 0
      %p104 = por %p102, %p103
      %p105 = scmp.ne.s32.totalorder %s91, %s92
      %p106 = scmp.eq.s32.totalorder %s20, 1
      %p107 = por %p105, %p106
      %p109 = scmp.ne.s32.totalorder %s92, %s108
      %p110 = scmp.eq.s32.totalorder %s20, 0
      %p111 = por %p109, %p110
      %s112 = ssub.s32 %s22, %s29
      %p113 = scmp.eq.s32.totalorder %s112, 0
      %s115 = sadd.s32 %s114, 1
      %s116 = scalar_select %p113, %s114, %s115
      %p119 = pneg %p113
      %p120 = scmp.eq.s32.totalorder %s14, 1
      %p121 = por %p119, %p120
      %p122 = scmp.ne.s32.totalorder %s114, %s117
      %p123 = scmp.eq.s32.totalorder %s14, 0
      %p124 = por %p122, %p123
      %p125 = scmp.ne.s32.totalorder %s114, %s117
      %p126 = scmp.eq.s32.totalorder %s19, 1
      %p127 = por %p125, %p126
      %p128 = scmp.ne.s32.totalorder %s117, %s118
      %p129 = scmp.eq.s32.totalorder %s19, 0
      %p130 = por %p128, %p129
      %p131 = scmp.ne.s32.totalorder %s117, %s118
      %p132 = scmp.eq.s32.totalorder %s20, 1
      %p133 = por %p131, %p132
      %p135 = scmp.ne.s32.totalorder %s118, %s134
      %p136 = scmp.eq.s32.totalorder %s20, 0
      %p137 = por %p135, %p136
      %s139 = sadd.s32 %s138, 1
      %p142 = scmp.eq.s32.totalorder %s14, 1
      %p143 = scmp.ne.s32.totalorder %s138, %s140
      %p144 = scmp.eq.s32.totalorder %s14, 0
      %p145 = por %p143, %p144
      %p146 = scmp.ne.s32.totalorder %s138, %s140
      %p147 = scmp.eq.s32.totalorder %s19, 1
      %p148 = por %p146, %p147
      %p149 = scmp.ne.s32.totalorder %s140, %s141
      %p150 = scmp.eq.s32.totalorder %s19, 0
      %p151 = por %p149, %p150
      %p152 = scmp.ne.s32.totalorder %s140, %s141
      %p153 = scmp.eq.s32.totalorder %s20, 1
      %p154 = por %p152, %p153
      %p156 = scmp.ne.s32.totalorder %s141, %s155
      %p157 = scmp.eq.s32.totalorder %s20, 0
      %p158 = por %p156, %p157
      %s159 = ssub.s32 %s21, %s33
      %p160 = scmp.eq.s32.totalorder %s159, 0
      %s162 = sadd.s32 %s161, 1
      %s163 = scalar_select %p160, %s161, %s162
      %p166 = pneg %p160
      %p167 = scmp.eq.s32.totalorder %s14, 1
      %p168 = por %p166, %p167
      %p169 = scmp.ne.s32.totalorder %s161, %s164
      %p170 = scmp.eq.s32.totalorder %s14, 0
      %p171 = por %p169, %p170
      %p172 = scmp.ne.s32.totalorder %s161, %s164
      %p173 = scmp.eq.s32.totalorder %s19, 1
      %p174 = por %p172, %p173
      %p175 = scmp.ne.s32.totalorder %s164, %s165
      %p176 = scmp.eq.s32.totalorder %s19, 0
      %p177 = por %p175, %p176
      %p178 = scmp.ne.s32.totalorder %s164, %s165
      %p179 = scmp.eq.s32.totalorder %s20, 1
      %p180 = por %p178, %p179
      %p182 = scmp.ne.s32.totalorder %s165, %s181
      %p183 = scmp.eq.s32.totalorder %s20, 0
      %p184 = por %p182, %p183
      %p185 = scmp.le.s32.totalorder 1, %s14
      %p186 = scmp.lt.s32.totalorder %s14, 3
      %p187 = pnand %p185, %p186
      %p188 = pneg %p187
      // Predicated region
      $region9: #{tpu_custom_call.1} parent=5 // pred_check
        _
      $region10: #{tpu_custom_call.1} parent=5 // pred_check_branch
        %190 = sbr.rel (%p187) target = $region12
      $region11: #{tpu_custom_call.1} parent=5 // pred_region
        %s191 = ssub.s32 %s14, 1
        // Predicated region
        $region13: #{tpu_custom_call.1} parent=11 // pred_check
          %p192 = pneg %p78
        $region14: #{tpu_custom_call.1} parent=11 // pred_check_branch
          %194 = sbr.rel (%p192) target = $region16
        $region15: #{tpu_custom_call.1} parent=11 // pred_region
          %p195 = scmp.lt.s32.totalorder %s24, 0
          %s196 = scalar_select %p195, %s24, 0
          %s197 = smul.addr %s196, 4
          %s198 = scalar_lea.vmem %s1, %s197
        $region16: #{tpu_custom_call.1} parent=11 // pred_fallthru
          _
        // Predicated region
        $region17: #{tpu_custom_call.1} parent=11 // pred_check
          %p199 = pneg %p104
        $region18: #{tpu_custom_call.1} parent=11 // pred_check_branch
          %201 = sbr.rel (%p199) target = $region20
        $region19: #{tpu_custom_call.1} parent=11 // pred_region
          %p202 = scmp.lt.s32.totalorder %s24, 0
          %s203 = scalar_select %p202, %s24, 0
          %s204 = scalar_lea.vmem %s2, %s203
        $region20: #{tpu_custom_call.1} parent=11 // pred_fallthru
          _
        // Predicated region
        $region21: #{tpu_custom_call.1} parent=11 // pred_check
          %p205 = pneg %p130
        $region22: #{tpu_custom_call.1} parent=11 // pred_check_branch
          %207 = sbr.rel (%p205) target = $region24
        $region23: #{tpu_custom_call.1} parent=11 // pred_region
          %s208 = smul.u32 8, %s24
          %p209 = scmp.lt.s32.totalorder %s208, 7
          %s210 = scalar_select %p209, %s208, 7
          %s211 = smul.addr %s210, 4
          %s212 = scalar_lea.vmem %s3, %s211
          %s213 = smul.u32 8, %s24
        $region24: #{tpu_custom_call.1} parent=11 // pred_fallthru
          _
        // Predicated region
        $region25: #{tpu_custom_call.1} parent=11 // pred_check
          %p214 = pneg %p151
        $region26: #{tpu_custom_call.1} parent=11 // pred_check_branch
          %216 = sbr.rel (%p214) target = $region28
        $region27: #{tpu_custom_call.1} parent=11 // pred_region
          _
        $region28: #{tpu_custom_call.1} parent=11 // pred_fallthru
          _
      $region12: #{tpu_custom_call.1} parent=5 // pred_fallthru
        _
      %p217 = scmp.lt.s32.totalorder %s14, 2
      // Predicated region
      $region29: #{tpu_custom_call.1} parent=5 // pred_check
        %p218 = pneg %p217
      $region30: #{tpu_custom_call.1} parent=5 // pred_check_branch
        %220 = sbr.rel (%p218) target = $region32
      $region31: #{tpu_custom_call.1} parent=5 // pred_region
        // Predicated region
        $region33: #{tpu_custom_call.1} parent=31 // pred_check
          %p221 = pneg %p46
        $region34: #{tpu_custom_call.1} parent=31 // pred_check_branch
          %223 = sbr.rel (%p221) target = $region36
        $region35: #{tpu_custom_call.1} parent=31 // pred_region
          %p224 = scmp.lt.s32.totalorder %s21, 1
          %s225 = scalar_select %p224, %s21, 1
          %s226 = smul.addr %s225, 4
          %s227 = scalar_lea.vmem %s0, %s226
        $region36: #{tpu_custom_call.1} parent=31 // pred_fallthru
          _
      $region32: #{tpu_custom_call.1} parent=5 // pred_fallthru
        _
      %p228 = scmp.le.s32.totalorder 1, %s14
      %p229 = scmp.lt.s32.totalorder %s14, 3
      %p230 = pnand %p228, %p229
      %p231 = pneg %p230
      // Predicated region
      $region37: #{tpu_custom_call.1} parent=5 // pred_check
        _
      $region38: #{tpu_custom_call.1} parent=5 // pred_check_branch
        %233 = sbr.rel (%p230) target = $region40
      $region39: #{tpu_custom_call.1} parent=5 // pred_region
        %s234 = ssub.s32 %s14, 1
        %p235 = scmp.lt.s32.totalorder %s23, 1
        %s236 = scalar_select %p235, %s23, 1
        %s237 = smul.addr %s236, 4
        %s238 = scalar_lea.vmem %s0, %s237
        %p239 = pneg %p52
        %p240 = pneg %p49
        %p241 = scmp.lt.s32.totalorder %s24, 0
        %s242 = scalar_select %p241, %s24, 0
        %s243 = smul.addr %s242, 4
        %s244 = scalar_lea.vmem %s1, %s243
        %p245 = pneg %p78
        %p246 = pneg %p75
        %p247 = scmp.lt.s32.totalorder %s24, 0
        %s248 = scalar_select %p247, %s24, 0
        %s249 = scalar_lea.vmem %s2, %s248
        %p250 = pneg %p104
        %p251 = pneg %p101
        %s252 = smul.u32 8, %s24
        %p253 = scmp.lt.s32.totalorder %s252, 7
        %s254 = scalar_select %p253, %s252, 7
        %s255 = smul.addr %s254, 4
        %s256 = scalar_lea.vmem %s3, %s255
        %p257 = pneg %p130
        %p258 = pneg %p127
        %p259 = pneg %p151
        %p260 = pneg %p148
        %p261 = pneg %p177
        %p262 = pneg %p174
        %s263 = sand.u32 %s164, 1
        %s264 = scalar_lea.sflag [#allocation4], %s263
        %s265 = sand.u32 %s164, 1
        %s266 = smul.addr %s265, 8
        %s267 = scalar_lea.vmem [#allocation3], %s266
        %p268 = scmp.lt.s32.totalorder %s23, 1
        %s269 = scalar_select %p268, %s23, 1
        %s270 = smul.addr %s269, 4
        %s271 = scalar_lea.vmem %s0, %s270
        %p272 = scmp.lt.s32.totalorder %s24, 0
        %s273 = scalar_select %p272, %s24, 0
        %s274 = smul.addr %s273, 4
        %s275 = scalar_lea.vmem %s1, %s274
        %p276 = scmp.lt.s32.totalorder %s24, 0
        %s277 = scalar_select %p276, %s24, 0
        %s278 = scalar_lea.vmem %s2, %s277
        %s279 = smul.u32 8, %s24
        %p280 = scmp.lt.s32.totalorder %s279, 7
        %s281 = scalar_select %p280, %s279, 7
        %s282 = smul.addr %s281, 4
        %s283 = scalar_lea.vmem %s3, %s282
        %s284 = smul.u32 8, %s24
        %p286 = scmp.eq.s32.totalorder %s24, 0
        // Predicated region
        $region41: #{tpu_custom_call.1} parent=39 // pred_check
          %p287 = pneg %p286
        $region42: #{tpu_custom_call.1} parent=39 // pred_check_branch
          %289 = sbr.rel (%p287) target = $region44
        $region43: #{tpu_custom_call.1} parent=39 // pred_region
          %vm290 = vcmask 261120
          %291 = vst.msk [vmem:[#allocation2] sm:$0xff] %vm290, 0.0
        $region44: #{tpu_custom_call.1} parent=39 // pred_fallthru
          _
        %v292 = vld [vmem:[%s271] sm:$0xf]
        %v293 = vld [vmem:[%s275] sm:$0xf]
        %v294 = vld [vmem:[%s275 + $0x4] sm:$0xf]
        %v295 = vld [vmem:[%s275 + $0x8] sm:$0xf]
        %v296 = vld [vmem:[%s275 + $0xc] sm:$0xf]
        %v297 = vld [vmem:[%s278] sm:$0x1]
        %v299 = vlaneseq
        %v300 = vshrl.u32 %v299, 7
        %v301 = vsub.s32 0, %v300
        %v302 = vrot.slane %v297, %v301
        %v308 = vunpack.c.l.b16 %v293
        %v309 = vunpack.c.l.b16 %v294
        %v310 = vunpack.c.l.b16 %v295
        %v311 = vunpack.c.l.b16 %v296
        %v312 = vpack.c.b16 %v309, %v308
        %v313 = vpack.c.b16 %v311, %v310
        %vm316 = vcmask 261120
        %v318 = vsel %vm316, %v292, 0
        %320 = vmatprep.subr.bf16.mxu0 0
        %321 = vmatpush1.bf16.msra.mxu0 %v312
        %322 = vmatprep.subr.bf16.mxu0 0
        %323 = vmatpush1.bf16.msra.mxu0 %v313
        %324 = vmatprep.subr.bf16.mxu0 0
        %325 = vmatpush1.bf16.msra.mxu0 0
        %326 = vmatprep.subr.bf16.mxu0 0
        %327 = vmatpush1.bf16.msra.mxu0 0
        %328 = vmatprep.subr.bf16.mxu0 0
        %329 = vmatpush1.bf16.msra.mxu0 0
        %330 = vmatprep.subr.bf16.mxu0 0
        %331 = vmatpush1.bf16.msra.mxu0 0
        %332 = vmatprep.subr.bf16.mxu0 0
        %333 = vmatpush1.bf16.msra.mxu0 0
        %334 = vmatprep.subr.bf16.mxu0 0
        %335 = vmatpush1.bf16.msra.mxu0 0
        %336 = vmatprep.subr.bf16.mxu0 0
        %337 = vmatpush1.bf16.msra.mxu0 0
        %338 = vmatprep.subr.bf16.mxu0 0
        %339 = vmatpush1.bf16.msra.mxu0 0
        %340 = vmatprep.subr.bf16.mxu0 0
        %341 = vmatpush1.bf16.msra.mxu0 0
        %342 = vmatprep.subr.bf16.mxu0 0
        %343 = vmatpush1.bf16.msra.mxu0 0
        %344 = vmatprep.subr.bf16.mxu0 0
        %345 = vmatpush1.bf16.msra.mxu0 0
        %346 = vmatprep.subr.bf16.mxu0 0
        %347 = vmatpush1.bf16.msra.mxu0 0
        %348 = vmatprep.subr.bf16.mxu0 0
        %349 = vmatpush1.bf16.msra.mxu0 0
        %350 = vmatprep.subr.bf16.mxu0 0
        %351 = vmatpush1.bf16.msra.mxu0 0
        %352 = vmatprep.mubr.bf16.mxu0 0
        %353 = vmatmul.mubr.bf16.gmra.mrb[0].mxu0 %v318
        %v354 = vpop.f32.mrb[0].mxu0
        %v355 = vadd.f32 %v302, %v354
        %v356 = vpop.f32.mrb[0].mxu0
        %v357 = vpop.f32.mrb[0].mxu0
        %v358 = vpop.f32.mrb[0].mxu0
        %359 = vdwg.mxu0
        %v360 = vmul.f32 %v355, 0.5
        %v361 = vmul.f32 %v355, 0.044715
        %v362 = vmul.f32 %v361, %v355
        %v363 = vmul.f32 %v362, %v355
        %v364 = vadd.f32 %v355, %v363
        %v365 = vmul.f32 %v364, 0.7978846
        %v366 = vtanh.pop %v365
        %v367 = vadd.f32 %v366, 1.0
        %v368 = vmul.f32 %v360, %v367
        %v369 = vld [vmem:[#allocation2] sm:$0xff]
        %v370 = vpack.c.bf16 %v368, %v368
        %v371 = vld [vmem:[%s283] sm:$0xf]
        %v372 = vld [vmem:[%s283 + $0x4] sm:$0xf]
        %v373 = vld [vmem:[%s283 + $0x8] sm:$0xf]
        %v374 = vld [vmem:[%s283 + $0xc] sm:$0xf]
        %v375 = vld [vmem:[%s283 + $0x10] sm:$0xf]
        %v376 = vld [vmem:[%s283 + $0x14] sm:$0xf]
        %v377 = vld [vmem:[%s283 + $0x18] sm:$0xf]
        %v378 = vld [vmem:[%s283 + $0x1c] sm:$0xf]
        %v387 = vunpack.c.l.b16 %v371
        %v388 = vunpack.c.l.b16 %v372
        %v389 = vunpack.c.l.b16 %v373
        %v390 = vunpack.c.l.b16 %v374
        %v391 = vunpack.c.l.b16 %v375
        %v392 = vunpack.c.l.b16 %v376
        %v393 = vunpack.c.l.b16 %v377
        %v394 = vunpack.c.l.b16 %v378
        %v395 = vpack.c.b16 %v388, %v387
        %v396 = vpack.c.b16 %v390, %v389
        %v397 = vpack.c.b16 %v392, %v391
        %v398 = vpack.c.b16 %v394, %v393
        %vm403 = vcmask 523264
        %v405 = vsel %vm403, %v370, 0
        %407 = vmatprep.subr.bf16.mxu0 0
        %408 = vmatpush1.bf16.msra.mxu0 %v395
        %409 = vmatprep.subr.bf16.mxu0 0
        %410 = vmatpush1.bf16.msra.mxu0 %v396
        %411 = vmatprep.subr.bf16.mxu0 0
        %412 = vmatpush1.bf16.msra.mxu0 %v397
        %413 = vmatprep.subr.bf16.mxu0 0
        %414 = vmatpush1.bf16.msra.mxu0 %v398
        %415 = vmatprep.subr.bf16.mxu0 0
        %416 = vmatpush1.bf16.msra.mxu0 0
        %417 = vmatprep.subr.bf16.mxu0 0
        %418 = vmatpush1.bf16.msra.mxu0 0
        %419 = vmatprep.subr.bf16.mxu0 0
        %420 = vmatpush1.bf16.msra.mxu0 0
        %421 = vmatprep.subr.bf16.mxu0 0
        %422 = vmatpush1.bf16.msra.mxu0 0
        %423 = vmatprep.subr.bf16.mxu0 0
        %424 = vmatpush1.bf16.msra.mxu0 0
        %425 = vmatprep.subr.bf16.mxu0 0
        %426 = vmatpush1.bf16.msra.mxu0 0
        %427 = vmatprep.subr.bf16.mxu0 0
        %428 = vmatpush1.bf16.msra.mxu0 0
        %429 = vmatprep.subr.bf16.mxu0 0
        %430 = vmatpush1.bf16.msra.mxu0 0
        %431 = vmatprep.subr.bf16.mxu0 0
        %432 = vmatpush1.bf16.msra.mxu0 0
        %433 = vmatprep.subr.bf16.mxu0 0
        %434 = vmatpush1.bf16.msra.mxu0 0
        %435 = vmatprep.subr.bf16.mxu0 0
        %436 = vmatpush1.bf16.msra.mxu0 0
        %437 = vmatprep.subr.bf16.mxu0 0
        %438 = vmatpush1.bf16.msra.mxu0 0
        %439 = vmatprep.mubr.bf16.mxu0 0
        %440 = vmatmul.mubr.bf16.gmra.mrb[0].mxu0 %v405
        %v441 = vpop.f32.mrb[0].mxu0
        %v442 = vadd.f32 0.0, %v441
        %v443 = vpop.f32.mrb[0].mxu0
        %v444 = vpop.f32.mrb[0].mxu0
        %v445 = vpop.f32.mrb[0].mxu0
        %446 = vdwg.mxu0
        %v447 = vadd.f32 %v369, %v442
        %448 = vst.msk [vmem:[#allocation2] sm:$0xff] %vm316, %v447
        // Predicated region
        $region45: #{tpu_custom_call.1} parent=39 // pred_check
          %p449 = pneg %p286
        $region46: #{tpu_custom_call.1} parent=39 // pred_check_branch
          %451 = sbr.rel (%p449) target = $region48
        $region47: #{tpu_custom_call.1} parent=39 // pred_region
          %v452 = vld [vmem:[#allocation2] sm:$0xff]
          %v453 = vld [vmem:[%s4] sm:$0x1]
          %v455 = vlaneseq
          %v456 = vshrl.u32 %v455, 7
          %v457 = vsub.s32 0, %v456
          %v458 = vrot.slane %v453, %v457
          %v460 = vadd.f32 %v452, %v458
          %461 = vst.msk [vmem:[%s267] sm:$0xff] %vm316, %v460
        $region48: #{tpu_custom_call.1} parent=39 // pred_fallthru
          _
        %s462 = sand.u32 %s164, 1
        %s463 = scalar_lea.sflag [#allocation4], %s462
        %s464 = sand.u32 %s164, 1
        %s465 = smul.addr %s464, 8
        %s466 = scalar_lea.vmem [#allocation3], %s465
        // Predicated region
        $region49: #{tpu_custom_call.1} parent=39 // pred_check
          %p467 = pneg %p174
        $region50: #{tpu_custom_call.1} parent=39 // pred_check_branch
          %469 = sbr.rel (%p467) target = $region52
        $region51: #{tpu_custom_call.1} parent=39 // pred_region
          %s471 = ssub.s32 128, 128
          %472 = vsyncadd %s463, %s471
          %s473 = smul.addr %s23, 128
          %s474 = scalar_lea.hbm %s5, %s473
          %s476 = sshll.u32 %s466, 4
          %s477 = int_to_ptr.vmem [resolvable:$true] %s476
          %479 = dma.vmem_to_hbm [thread:$0]  %s477, 128, %s474, %s463
        $region52: #{tpu_custom_call.1} parent=39 // pred_fallthru
          _
      $region40: #{tpu_custom_call.1} parent=5 // pred_fallthru
        _
      %p480 = scmp.le.s32.totalorder 2, %s14
      // Predicated region
      $region53: #{tpu_custom_call.1} parent=5 // pred_check
        %p481 = pneg %p480
      $region54: #{tpu_custom_call.1} parent=5 // pred_check_branch
        %483 = sbr.rel (%p481) target = $region56
      $region55: #{tpu_custom_call.1} parent=5 // pred_region
        %s484 = ssub.s32 %s14, 2
        // Predicated region
        $region57: #{tpu_custom_call.1} parent=55 // pred_check
          %p485 = pneg %p180
        $region58: #{tpu_custom_call.1} parent=55 // pred_check_branch
          %487 = sbr.rel (%p485) target = $region60
        $region59: #{tpu_custom_call.1} parent=55 // pred_region
          %s488 = sand.u32 %s165, 1
          %s489 = scalar_lea.sflag [#allocation4], %s488
          %s490 = sand.u32 %s165, 1
          %s491 = smul.addr %s490, 8
          %s492 = scalar_lea.vmem [#allocation3], %s491
          %493 = dma.done %s489, 128
        $region60: #{tpu_custom_call.1} parent=55 // pred_fallthru
          _
      $region56: #{tpu_custom_call.1} parent=5 // pred_fallthru
        _
    $region6: #{tpu_custom_call.1} parent=1 // loop_footer
      %s18 = sadd.s32 1, %s14
    $region7: #{tpu_custom_call.1} parent=1 // loop_footer_branch
      %13 = sbr.rel target = $region3
    $region8: #{tpu_custom_call.1} parent=1 // loop_exit
      _
    %494 = vsyncpa [#allocation4], 1
    %s495 = scalar_lea.sflag [#allocation4], 1
    %496 = vsyncpa %s495, 1

</llo_original>
